<compile_context>
chip_gen: v7x
topology: tpu7x:2x2x1
jax: 0.10.0
libtpu: 0.0.40
codegen_flags: <defaults>
</compile_context>

<pallas_src>
import functools
from typing import NamedTuple, Tuple

import jax
import jax.numpy as jnp
from jax.experimental import pallas as pl
from jax.experimental.pallas import tpu as pltpu


_TM_CANDIDATES = (512, 256, 128, 64, 32, 16, 8)


def _rup(a, m):
    return ((a + m - 1) // m) * m


# ---------------------------------------------------------------------------
# Generation-aware VMEM budgeting (v5e/v6e: 128 MiB, v7x: 64 MiB per TC).
# ---------------------------------------------------------------------------
@functools.lru_cache(maxsize=None)
def _vmem_capacity_bytes():
    try:
        return int(pltpu.get_tpu_info().vmem_capacity_bytes)
    except Exception:
        return 64 * 1024 * 1024  # conservative fallback (v7x per-TC size)


def _vmem_fit_budget():
    # Threshold for the fused-vs-fallback decision; kept well below the actual
    # compiler limit so estimation error cannot cause a compile-time failure.
    return int(0.70 * _vmem_capacity_bytes())


def _vmem_limit_bytes():
    # Scoped limit handed to Mosaic (raised above the 16/32 MiB default).
    return int(0.85 * _vmem_capacity_bytes())


# ---------------------------------------------------------------------------
# Parameter preparation: cast + feature-dim pad ONCE (out of the hot path).
# ---------------------------------------------------------------------------
class PreparedMLP(NamedTuple):
    weights: Tuple          # padded, compute-dtype, shape (Kp_l, Np_{l+1})
    biases: Tuple           # padded, f32, shape (1, Np_{l+1})
    dims: Tuple             # original feature dims (K0, U1, ..., Un)
    dims_p: Tuple           # 128-padded feature dims
    compute_dtype: jnp.dtype


def prepare_mlp_params(params, *, compute_dtype=jnp.bfloat16):
    cdt = jnp.dtype(compute_dtype)
    dims = [int(params[0][0].shape[0])] + [int(w.shape[1]) for w, _ in params]
    dims_p = [_rup(d, 128) for d in dims]
    ws, bs = [], []
    for l, (w, b) in enumerate(params):
        Kl, Nl = w.shape
        Kp, Np = dims_p[l], dims_p[l + 1]
        w_c = w.astype(cdt)
        if (Kp, Np) != (Kl, Nl):
            w_c = jnp.pad(w_c, ((0, Kp - Kl), (0, Np - Nl)))
        b_c = b.reshape(1, Nl).astype(jnp.float32)
        if Np != Nl:
            b_c = jnp.pad(b_c, ((0, 0), (0, Np - Nl)))
        ws.append(w_c)
        bs.append(b_c)
    return PreparedMLP(tuple(ws), tuple(bs), tuple(dims), tuple(dims_p), cdt)


# ---------------------------------------------------------------------------
# Fused whole-MLP kernel: weights, biases and intermediates resident in VMEM.
# ---------------------------------------------------------------------------
def _make_fused_mlp_kernel(n_layers, compute_dtype):
    def kernel(x_ref, *refs):
        # refs = [w0, b0, w1, b1, ..., o_ref]
        o_ref = refs[-1]
        h = x_ref[...].astype(compute_dtype)      # cast in vregs, not in XLA
        for l in range(n_layers):
            w_ref, b_ref = refs[2 * l], refs[2 * l + 1]
            h = jnp.dot(h, w_ref[...], preferred_element_type=jnp.float32)
            h = h + b_ref[...]                     # f32 bias, broadcast over rows
            if l != n_layers - 1:
                h = jnp.maximum(h, 0.0).astype(compute_dtype)  # ReLU; Dropout=id (eval)
        o_ref[...] = h.astype(o_ref.dtype)

    return kernel


def _fused_vmem_bytes(tm, dims_p, x_itemsize, compute_dtype, out_itemsize):
    """Estimated peak VMEM of the fused kernel for a given batch tile tm."""
    isz = jnp.dtype(compute_dtype).itemsize
    n = len(dims_p) - 1
    total = 2 * tm * dims_p[0] * x_itemsize               # x tile (double-buffered)
    for l in range(n):
        total += dims_p[l] * dims_p[l + 1] * isz           # weight (Buffered(1))
        total += 8 * dims_p[l + 1] * 4                     # bias (sublane-padded f32)
    total += 2 * tm * dims_p[-1] * out_itemsize            # out tile (double-buffered)
    # Widest consecutive live pair: dot input (compute dtype) + f32 dot result.
    total += max(tm * dims_p[l] * isz + tm * dims_p[l + 1] * 4 for l in range(n))
    total += 2 * 1024 * 1024                               # Mosaic internal scratch headroom
    return total


def _pick_fused_tm(M, dims_p, x_itemsize, compute_dtype, out_itemsize, budget):
    """Largest batch tile that fits the VMEM budget; None if even tm=8 doesn't."""
    m8 = _rup(max(M, 1), 8)
    for tm in _TM_CANDIDATES:
        if tm > m8:
            continue
        # Keep >= 2 parallel grid steps whenever the batch allows it so both
        # TensorCores are used on v7x; negligible cost (~0.35 us) on 1-TC chips.
        if M >= 16 and pl.cdiv(M, tm) < 2:
            continue
        if _fused_vmem_bytes(tm, dims_p, x_itemsize, compute_dtype,
                             out_itemsize) <= budget:
            return tm
    return None


def fused_mlp(x, prep: PreparedMLP, *, tm=None):
    """Whole-MLP forward in a single pallas_call (grid over batch tiles only)."""
    M, K0 = x.shape
    assert K0 == prep.dims[0]
    out_dtype = x.dtype
    n = len(prep.weights)
    dims_p = prep.dims_p

    if tm is None:
        tm = _pick_fused_tm(M, dims_p, jnp.dtype(x.dtype).itemsize,
                            prep.compute_dtype, jnp.dtype(out_dtype).itemsize,
                            _vmem_fit_budget())
    if tm is None:
        raise ValueError("fused MLP does not fit the VMEM budget")

    # Only zero-pad the feature dim (exact); the batch dim is never padded —
    # the ragged last batch tile is handled by Pallas edge-block clipping.
    x_in = x
    if dims_p[0] != K0:
        x_in = jnp.pad(x, ((0, 0), (0, dims_p[0] - K0)))

    grid = (pl.cdiv(M, tm),)
    in_specs = [pl.BlockSpec((tm, dims_p[0]), lambda i: (i, 0))]
    flat_args = [x_in]
    for l in range(n):
        w, b = prep.weights[l], prep.biases[l]
        flat_args += [w, b]
        # Grid-invariant operands: single-buffered (no 2x VMEM for weights).
        in_specs += [
            pl.BlockSpec(w.shape, lambda i: (0, 0), pipeline_mode=pl.Buffered(1)),
            pl.BlockSpec(b.shape, lambda i: (0, 0), pipeline_mode=pl.Buffered(1)),
        ]
    out_specs = pl.BlockSpec((tm, dims_p[-1]), lambda i: (i, 0))

    flops = int(sum(2 * M * dims_p[l] * dims_p[l + 1] for l in range(n)))
    bytes_accessed = int(
        sum(int(a.size) * a.dtype.itemsize for a in flat_args)
        + M * dims_p[-1] * jnp.dtype(out_dtype).itemsize
    )

    out = pl.pallas_call(
        _make_fused_mlp_kernel(n, prep.compute_dtype),
        out_shape=jax.ShapeDtypeStruct((M, dims_p[-1]), out_dtype),
        grid_spec=pltpu.PrefetchScalarGridSpec(
            num_scalar_prefetch=0,
            grid=grid,
            in_specs=in_specs,
            out_specs=out_specs,
        ),
        compiler_params=pltpu.CompilerParams(
            dimension_semantics=("parallel",),
            vmem_limit_bytes=_vmem_limit_bytes(),
        ),
        cost_estimate=pl.CostEstimate(
            flops=flops, transcendentals=0, bytes_accessed=bytes_accessed
        ),
    )(*flat_args)

    if dims_p[-1] != prep.dims[-1]:
        out = out[:, :prep.dims[-1]]
    return out


# ---------------------------------------------------------------------------
# Per-layer tiled fallback (used only when the fused MLP would not fit VMEM).
# ---------------------------------------------------------------------------
def _linear_kernel_single_k(x_ref, w_ref, b_ref, o_ref, *, apply_relu, compute_dtype):
    out = jnp.dot(x_ref[...].astype(compute_dtype), w_ref[...],
                  preferred_element_type=jnp.float32)
    out = out + b_ref[...]
    if apply_relu:
        out = jnp.maximum(out, 0.0)
    o_ref[...] = out.astype(o_ref.dtype)


def _linear_kernel_multi_k(x_ref, w_ref, b_ref, o_ref, acc_ref, *,
                           apply_relu, compute_dtype):
    k = pl.program_id(2)

    @pl.when(k == 0)
    def _():
        acc_ref[...] = jnp.zeros_like(acc_ref)

    acc_ref[...] += jnp.dot(x_ref[...].astype(compute_dtype), w_ref[...],
                            preferred_element_type=jnp.float32)

    @pl.when(k == pl.num_programs(2) - 1)
    def _():
        out = acc_ref[...] + b_ref[...]
        if apply_relu:
            out = jnp.maximum(out, 0.0)
        o_ref[...] = out.astype(o_ref.dtype)


def _feature_tile(d):
    # MXU-friendly tiles: multiples of 256 on the large side (v6e/v7x 2x256x256
    # MXU), plain 128-rounding for small dims (fine on v5e's 4x128x128).
    dp = _rup(d, 128)
    if dp >= 512:
        return 512
    if dp >= 256:
        return 256
    return dp


def pallas_linear(x, w, b, *, apply_relu, compute_dtype):
    """y = relu?(x @ w + b), tiled Pallas kernel; feature dims padded as needed."""
    M, K = x.shape
    K2, N = w.shape
    assert K == K2 and b.shape == (1, N)
    out_dtype = x.dtype
    cdt = jnp.dtype(compute_dtype)

    tn = _feature_tile(N)
    tk = _feature_tile(K)
    N_pad = _rup(N, tn)
    K_pad = _rup(K, tk)

    m8 = _rup(M, 8)
    tm = next(t for t in _TM_CANDIDATES if t <= m8)
    nj = N_pad // tn
    nk = K_pad // tk
    ni = pl.cdiv(M, tm)
    if ni * nj < 2 and M >= 16:      # keep both v7x TensorCores busy
        tm = max(8, _rup((M + 1) // 2, 8))
        ni = pl.cdiv(M, tm)

    w_c = w.astype(cdt)
    b_c = b.astype(jnp.float32)
    x_in = x
    if K_pad != K:
        x_in = jnp.pad(x, ((0, 0), (0, K_pad - K)))
        w_c = jnp.pad(w_c, ((0, K_pad - K), (0, 0)))
    if N_pad != N:
        w_c = jnp.pad(w_c, ((0, 0), (0, N_pad - N)))
        b_c = jnp.pad(b_c, ((0, 0), (0, N_pad - N)))

    flops = int(2 * M * N_pad * K_pad)
    bytes_accessed = int(
        x_in.size * x_in.dtype.itemsize + w_c.size * w_c.dtype.itemsize
        + b_c.size * 4 + M * N_pad * jnp.dtype(out_dtype).itemsize
    )

    if nk == 1:
        kernel = functools.partial(_linear_kernel_single_k,
                                   apply_relu=apply_relu, compute_dtype=cdt)
        # Grid order: stream the larger operand from HBM only once.
        w_restream = K_pad * N_pad * cdt.itemsize * (ni - 1)        # (i,j) order
        x_restream = M * K_pad * x_in.dtype.itemsize * (nj - 1)     # (j,i) order
        if w_restream > x_restream:
            grid = (nj, ni)                       # batch innermost: weights read once
            in_specs = [
                pl.BlockSpec((tm, K_pad), lambda j, i: (i, 0)),
                pl.BlockSpec((K_pad, tn), lambda j, i: (0, j)),
                pl.BlockSpec((1, tn), lambda j, i: (0, j)),
            ]
            out_specs = pl.BlockSpec((tm, tn), lambda j, i: (i, j))
        else:
            grid = (ni, nj)
            in_specs = [
                pl.BlockSpec((tm, K_pad), lambda i, j: (i, 0)),
                pl.BlockSpec((K_pad, tn), lambda i, j: (0, j)),
                pl.BlockSpec((1, tn), lambda i, j: (0, j)),
            ]
            out_specs = pl.BlockSpec((tm, tn), lambda i, j: (i, j))
        scratch = []
        sem = ("parallel", "parallel")
    else:
        kernel = functools.partial(_linear_kernel_multi_k,
                                   apply_relu=apply_relu, compute_dtype=cdt)
        grid = (ni, nj, nk)
        in_specs = [
            pl.BlockSpec((tm, tk), lambda i, j, k: (i, k)),
            pl.BlockSpec((tk, tn), lambda i, j, k: (k, j)),
            pl.BlockSpec((1, tn), lambda i, j, k: (0, j)),
        ]
        out_specs = pl.BlockSpec((tm, tn), lambda i, j, k: (i, j))
        scratch = [pltpu.VMEM((tm, tn), jnp.float32)]
        sem = ("parallel", "parallel", "arbitrary")

    out = pl.pallas_call(
        kernel,
        out_shape=jax.ShapeDtypeStruct((M, N_pad), out_dtype),
        grid_spec=pltpu.PrefetchScalarGridSpec(
            num_scalar_prefetch=0,
            grid=grid,
            in_specs=in_specs,
            out_specs=out_specs,
            scratch_shapes=scratch,
        ),
        compiler_params=pltpu.CompilerParams(
            dimension_semantics=sem,
            vmem_limit_bytes=_vmem_limit_bytes(),
        ),
        cost_estimate=pl.CostEstimate(
            flops=flops, transcendentals=0, bytes_accessed=bytes_accessed
        ),
    )(x_in, w_c, b_c)

    if N_pad != N:
        out = out[:, :N]
    return out


# ---------------------------------------------------------------------------
# MLPlayers forward (inference / eval mode).
# ---------------------------------------------------------------------------
def mlp_layers_forward(x, params, *, compute_dtype=jnp.bfloat16,
                       force_per_layer=False):
    """Pallas implementation of MLPlayers.forward.

    `params` is either a list of (w [in,out], b [1,out]) arrays or a
    PreparedMLP from prepare_mlp_params (preferred: cast/pad happens once).
    """
    prep = params if isinstance(params, PreparedMLP) else prepare_mlp_params(
        params, compute_dtype=compute_dtype)

    if not force_per_layer:
        tm = _pick_fused_tm(x.shape[0], prep.dims_p,
                            jnp.dtype(x.dtype).itemsize, prep.compute_dtype,
                            jnp.dtype(x.dtype).itemsize, _vmem_fit_budget())
        if tm is not None:
            return fused_mlp(x, prep, tm=tm)

    # Per-layer tiled fallback (weights too large to keep fully VMEM-resident).
    # TODO(synk): hybrid single-pallas_call fallback that keeps activations
    # VMEM-resident and streams oversized weights via pltpu.emit_pipeline.
    # TODO(synk): training-mode stochastic dropout (pltpu.prng_*) not implemented.
    # TODO(synk): fp8 (v7x) / int8 (v5e,v6e) weight paths with per-channel scales.
    n = len(prep.weights)
    h = x
    if prep.dims_p[0] != prep.dims[0]:
        h = jnp.pad(h, ((0, 0), (0, prep.dims_p[0] - prep.dims[0])))
    for l in range(n):
        h = pallas_linear(h, prep.weights[l], prep.biases[l],
                          apply_relu=(l != n - 1),
                          compute_dtype=prep.compute_dtype)
        # Dropout is identity in eval mode.
    if prep.dims_p[-1] != prep.dims[-1]:
        h = h[:, :prep.dims[-1]]
    return h


def mlp_layers_reference(x, params, compute_dtype=jnp.bfloat16):
    """Plain-JAX reference (mirrors the kernel's compute-dtype casting)."""
    cdt = jnp.dtype(compute_dtype)
    n = len(params)
    h = x.astype(cdt)
    for idx, (w, b) in enumerate(params):
        h = jnp.dot(h, w.astype(cdt), preferred_element_type=jnp.float32)
        h = h + b.astype(jnp.float32)
        if idx != n - 1:
            h = jnp.maximum(h, 0.0).astype(cdt)
    return h.astype(x.dtype)


def init_mlp_params(key, units):
    """Deterministic init mimicking nn.Linear's U(-1/sqrt(in), 1/sqrt(in))."""
    params = []
    for u0, u1 in zip(units[:-1], units[1:]):
        key, kw, kb = jax.random.split(key, 3)
        bound = 1.0 / jnp.sqrt(jnp.float32(u0))
        w = jax.random.uniform(kw, (u0, u1), jnp.float32, -bound, bound)
        b = jax.random.uniform(kb, (1, u1), jnp.float32, -bound, bound)
        params.append((w, b))
    return params


if __name__ == "__main__":
    key = jax.random.PRNGKey(0)

    # --- Case 1: fused path, default bf16 compute (f32 accumulation). -------
    units = [128, 256, 128]
    batch = 8
    key, kx, kp = jax.random.split(key, 3)
    x = jax.random.normal(kx, (batch, units[0]), jnp.float32)
    params = init_mlp_params(kp, units)
    prep_bf16 = prepare_mlp_params(params)            # cast/pad once, reused below
    out = jax.block_until_ready(mlp_layers_forward(x, prep_bf16))
    ref = mlp_layers_reference(x, params)
    assert out.shape == (batch, units[-1])
    assert jnp.allclose(out, ref, atol=3e-2, rtol=3e-2)

    # --- Case 2: fused path, explicit f32 compute, tight tolerance. ---------
    out_f32 = jax.block_until_ready(
        mlp_layers_forward(x, params, compute_dtype=jnp.float32))
    ref_f32 = mlp_layers_reference(x, params, compute_dtype=jnp.float32)
    assert jnp.allclose(out_f32, ref_f32, atol=1e-4, rtol=1e-4)

    # --- Case 3: ragged, non-128-aligned feature dims (padded, exact). ------
    units3 = [100, 300, 50]
    key, kx3, kp3 = jax.random.split(key, 3)
    x3 = jax.random.normal(kx3, (5, units3[0]), jnp.float32)
    params3 = init_mlp_params(kp3, units3)
    out3 = jax.block_until_ready(
        mlp_layers_forward(x3, params3, compute_dtype=jnp.float32))
    ref3 = mlp_layers_reference(x3, params3, compute_dtype=jnp.float32)
    assert out3.shape == (5, units3[-1])
    assert jnp.allclose(out3, ref3, atol=1e-4, rtol=1e-4)

    # --- Case 4: per-layer tiled fallback (exercises the K-accum path). -----
    units4 = [640, 96, 48]
    key, kx4, kp4 = jax.random.split(key, 3)
    x4 = jax.random.normal(kx4, (16, units4[0]), jnp.float32)
    params4 = init_mlp_params(kp4, units4)
    out4 = jax.block_until_ready(
        mlp_layers_forward(x4, params4, compute_dtype=jnp.float32,
                           force_per_layer=True))
    ref4 = mlp_layers_reference(x4, params4, compute_dtype=jnp.float32)
    assert out4.shape == (16, units4[-1])
    assert jnp.allclose(out4, ref4, atol=1e-4, rtol=1e-4)

    # --- Case 5: multi-step ragged batch grid (no batch-dim padding). -------
    key, kx5 = jax.random.split(key)
    x5 = jax.random.normal(kx5, (300, units[0]), jnp.float32)
    out5 = jax.block_until_ready(mlp_layers_forward(x5, prep_bf16))
    ref5 = mlp_layers_reference(x5, params)
    assert out5.shape == (300, units[-1])
    assert jnp.allclose(out5, ref5, atol=3e-2, rtol=3e-2)

    print("KERNEL_OK")
</pallas_src>

<mosaic_0001>
module attributes {stable_mosaic.version = 11 : i64} {
  func.func @kernel(%arg0: i32, %arg1: memref<8x128xf32, #tpu.memory_space<vmem>>, %arg2: memref<128x256xbf16, #tpu.memory_space<vmem>>, %arg3: memref<1x256xf32, #tpu.memory_space<vmem>>, %arg4: memref<256x128xbf16, #tpu.memory_space<vmem>>, %arg5: memref<1x128xf32, #tpu.memory_space<vmem>>, %arg6: memref<8x128xf32, #tpu.memory_space<vmem>>) attributes {dimension_semantics = [#tpu.dimension_semantics<parallel>], iteration_bounds = array<i64: 1>, scalar_prefetch = 0 : i64, scratch_operands = 0 : i64, tpu.core_type = #tpu.core_type<tc>, window_params = [{transform_indices = @transform_0, window_bounds = array<i64: 8, 128>}, {pipeline_mode = #tpu.pipeline_mode<synchronous>, transform_indices = @transform_1, window_bounds = array<i64: 128, 256>}, {pipeline_mode = #tpu.pipeline_mode<synchronous>, transform_indices = @transform_2, window_bounds = array<i64: 1, 256>}, {pipeline_mode = #tpu.pipeline_mode<synchronous>, transform_indices = @transform_3, window_bounds = array<i64: 256, 128>}, {pipeline_mode = #tpu.pipeline_mode<synchronous>, transform_indices = @transform_4, window_bounds = array<i64: 1, 128>}, {transform_indices = @transform_5, window_bounds = array<i64: 8, 128>}]} {
    %c0 = arith.constant 0 : index
    %c0_0 = arith.constant 0 : index
    %0 = vector.load %arg1[%c0, %c0_0] : memref<8x128xf32, #tpu.memory_space<vmem>>, vector<8x128xf32>
    %1 = arith.truncf %0 : vector<8x128xf32> to vector<8x128xbf16>
    %c0_1 = arith.constant 0 : index
    %c0_2 = arith.constant 0 : index
    %2 = vector.load %arg2[%c0_1, %c0_2] : memref<128x256xbf16, #tpu.memory_space<vmem>>, vector<128x256xbf16>
    %cst = arith.constant dense<0.000000e+00> : vector<8x256xf32>
    %3 = tpu.matmul %1, %2, %cst {dimension_numbers = #tpu.dot_dimension_numbers<[1], [0], [0], [1], [0, 0, 1, 1], [], []>} : vector<8x128xbf16>, vector<128x256xbf16>, vector<8x256xf32> -> vector<8x256xf32>
    %c0_3 = arith.constant 0 : index
    %c0_4 = arith.constant 0 : index
    %4 = vector.load %arg3[%c0_3, %c0_4] : memref<1x256xf32, #tpu.memory_space<vmem>>, vector<1x256xf32>
    %5 = vector.broadcast %4 : vector<1x256xf32> to vector<8x256xf32>
    %6 = arith.addf %3, %5 : vector<8x256xf32>
    %cst_5 = arith.constant 0.000000e+00 : f32
    %7 = vector.broadcast %cst_5 : f32 to vector<8x256xf32>
    %8 = arith.maximumf %6, %7 : vector<8x256xf32>
    %9 = arith.truncf %8 : vector<8x256xf32> to vector<8x256xbf16>
    %c0_6 = arith.constant 0 : index
    %c0_7 = arith.constant 0 : index
    %10 = vector.load %arg4[%c0_6, %c0_7] : memref<256x128xbf16, #tpu.memory_space<vmem>>, vector<256x128xbf16>
    %cst_8 = arith.constant dense<0.000000e+00> : vector<8x128xf32>
    %11 = tpu.matmul %9, %10, %cst_8 {dimension_numbers = #tpu.dot_dimension_numbers<[1], [0], [0], [1], [0, 0, 1, 1], [], []>} : vector<8x256xbf16>, vector<256x128xbf16>, vector<8x128xf32> -> vector<8x128xf32>
    %c0_9 = arith.constant 0 : index
    %c0_10 = arith.constant 0 : index
    %12 = vector.load %arg5[%c0_9, %c0_10] : memref<1x128xf32, #tpu.memory_space<vmem>>, vector<1x128xf32>
    %13 = vector.broadcast %12 : vector<1x128xf32> to vector<8x128xf32>
    %14 = arith.addf %11, %13 : vector<8x128xf32>
    %c0_11 = arith.constant 0 : index
    %c0_12 = arith.constant 0 : index
    %15 = vector.load %arg6[%c0_11, %c0_12] : memref<8x128xf32, #tpu.memory_space<vmem>>, vector<8x128xf32>
    tpu.vector_store %arg6[%c0_11, %c0_12], %14 {strides = array<i32>} : memref<8x128xf32, #tpu.memory_space<vmem>>, vector<8x128xf32>,
    return
  }
  func.func @transform_0(%arg0: i32) -> (i32, i32) {
    %c0_i32 = arith.constant 0 : i32
    %c0_i32_0 = arith.constant 0 : i32
    return %arg0, %c0_i32 : i32, i32
  }
  func.func @transform_1(%arg0: i32) -> (i32, i32) {
    %c0_i32 = arith.constant 0 : i32
    %c0_i32_0 = arith.constant 0 : i32
    %c0_i32_1 = arith.constant 0 : i32
    return %c0_i32, %c0_i32_0 : i32, i32
  }
  func.func @transform_2(%arg0: i32) -> (i32, i32) {
    %c0_i32 = arith.constant 0 : i32
    %c0_i32_0 = arith.constant 0 : i32
    %c0_i32_1 = arith.constant 0 : i32
    return %c0_i32, %c0_i32_0 : i32, i32
  }
  func.func @transform_3(%arg0: i32) -> (i32, i32) {
    %c0_i32 = arith.constant 0 : i32
    %c0_i32_0 = arith.constant 0 : i32
    %c0_i32_1 = arith.constant 0 : i32
    return %c0_i32, %c0_i32_0 : i32, i32
  }
  func.func @transform_4(%arg0: i32) -> (i32, i32) {
    %c0_i32 = arith.constant 0 : i32
    %c0_i32_0 = arith.constant 0 : i32
    %c0_i32_1 = arith.constant 0 : i32
    return %c0_i32, %c0_i32_0 : i32, i32
  }
  func.func @transform_5(%arg0: i32) -> (i32, i32) {
    %c0_i32 = arith.constant 0 : i32
    %c0_i32_0 = arith.constant 0 : i32
    return %arg0, %c0_i32 : i32, i32
  }
}

</mosaic_0001>

<llo_original>
// kernel: tpu_custom_call.1
$region0: #{tpu_custom_call.1}
  #allocation0 [shape = 'u32[]', space=smem, size = 0x4, offset = 0x4, fixed_abs, tag = 'smem constant byte address 0x4 - core index']
  #allocation1 [shape = 'u32[144,128]{1,0:T(1,128)}', space=vmem, size = 0x12000, scoped, tag = 'internal scratch']
  %s0 = inlined_call_operand.hbm [shape: f32[8,128], index: 0, kind: input, shape index: {}]
  %s1 = inlined_call_operand.hbm [shape: bf16[128,256], index: 1, kind: input, shape index: {}]
  %s2 = inlined_call_operand.vmem [shape: f32[1,256], index: 2, kind: input, shape index: {}]
  %s3 = inlined_call_operand.hbm [shape: bf16[256,128], index: 3, kind: input, shape index: {}]
  %s4 = inlined_call_operand.vmem [shape: f32[1,128], index: 4, kind: input, shape index: {}]
  %s5 = inlined_call_operand.hbm [shape: f32[8,128], index: 5, kind: output, shape index: {}]
  %s6 = sld [smem:[#allocation0]]
  $region42: #{tpu_custom_call.1} parent=0
    _
  %s8 = ssub.s32 1, %s6
  %s9 = scalar_select 0, %s8, %s6
  $region1: #{tpu_custom_call.1} parent=0
    #allocation2 [shape = 'u8[4096]{0}', space=vmem, size = 0x1000, scoped, tag = 'input window, operand 0, single buffered']
    #allocation3 [shape = 's32[1]{0}', space=sflag, size = 0x4, scoped, tag = 'scoped memory for tpu_custom_call.1']
    #allocation4 [shape = 's32[1]{0}', space=sflag, size = 0x4, scoped, tag = 'scoped memory for tpu_custom_call.1']
    #allocation5 [shape = 'u8[65536]{0}', space=vmem, size = 0x10000, scoped, tag = 'input window, operand 1, single buffered']
    #allocation6 [shape = 's32[1]{0}', space=sflag, size = 0x4, scoped, tag = 'scoped memory for tpu_custom_call.1']
    #allocation7 [shape = 'u8[65536]{0}', space=vmem, size = 0x10000, scoped, tag = 'input window, operand 3, single buffered']
    #allocation8 [shape = 'u8[4096]{0}', space=vmem, size = 0x1000, scoped, tag = 'output window, operand 0, single buffered']
    %10 = vsyncpa [#allocation3], 0
    %11 = vsyncpa [#allocation6], 0
    %12 = vsyncpa [#allocation4], 0
    // Predicated region
    $region2: #{tpu_custom_call.1} parent=1 // pred_check
      _
    $region3: #{tpu_custom_call.1} parent=1 // pred_check_branch
      %14 = sbr.rel (0) target = $region5
    $region4: #{tpu_custom_call.1} parent=1 // pred_region
      %s16 = ssub.s32 128, 128
      %17 = vsyncadd [#allocation3], %s16
      %s19 = sshll.u32 [#allocation2], 4
      %s20 = int_to_ptr.vmem [resolvable:$true] %s19
      %22 = dma.hbm_to_vmem [thread:$0]  %s0, 128, %s20, [#allocation3]
    $region5: #{tpu_custom_call.1} parent=1 // pred_fallthru
      _
    // Predicated region
    $region6: #{tpu_custom_call.1} parent=1 // pred_check
      _
    $region7: #{tpu_custom_call.1} parent=1 // pred_check_branch
      %24 = sbr.rel (0) target = $region9
    $region8: #{tpu_custom_call.1} parent=1 // pred_region
      %s26 = ssub.s32 2048, 2048
      %27 = vsyncadd [#allocation6], %s26
      %s28 = sshll.u32 [#allocation5], 4
      %s29 = int_to_ptr.vmem [resolvable:$true] %s28
      %34 = dma.hbm_to_vmem [thread:$0]  %s1, 2048, %s29, [#allocation6], 128, 128, 8
    $region9: #{tpu_custom_call.1} parent=1 // pred_fallthru
      _
    // Predicated region
    $region10: #{tpu_custom_call.1} parent=1 // pred_check
      _
    $region11: #{tpu_custom_call.1} parent=1 // pred_check_branch
      %36 = sbr.rel (0) target = $region13
    $region12: #{tpu_custom_call.1} parent=1 // pred_region
      _
    $region13: #{tpu_custom_call.1} parent=1 // pred_fallthru
      _
    // Predicated region
    $region14: #{tpu_custom_call.1} parent=1 // pred_check
      _
    $region15: #{tpu_custom_call.1} parent=1 // pred_check_branch
      %38 = sbr.rel (0) target = $region17
    $region16: #{tpu_custom_call.1} parent=1 // pred_region
      %s40 = ssub.s32 2048, 2048
      %41 = vsyncadd [#allocation6], %s40
      %s42 = sshll.u32 [#allocation7], 4
      %s43 = int_to_ptr.vmem [resolvable:$true] %s42
      %48 = dma.hbm_to_vmem [thread:$0]  %s3, 2048, %s43, [#allocation6], 64, 64, 4
    $region17: #{tpu_custom_call.1} parent=1 // pred_fallthru
      _
    // Predicated region
    $region18: #{tpu_custom_call.1} parent=1 // pred_check
      _
    $region19: #{tpu_custom_call.1} parent=1 // pred_check_branch
      %50 = sbr.rel (0) target = $region21
    $region20: #{tpu_custom_call.1} parent=1 // pred_region
      _
    $region21: #{tpu_custom_call.1} parent=1 // pred_fallthru
      _
    // Predicated region
    $region22: #{tpu_custom_call.1} parent=1 // pred_check
      _
    $region23: #{tpu_custom_call.1} parent=1 // pred_check_branch
      %52 = sbr.rel (0) target = $region25
    $region24: #{tpu_custom_call.1} parent=1 // pred_region
      %53 = dma.done [#allocation3], 128
    $region25: #{tpu_custom_call.1} parent=1 // pred_fallthru
      _
    // Predicated region
    $region26: #{tpu_custom_call.1} parent=1 // pred_check
      _
    $region27: #{tpu_custom_call.1} parent=1 // pred_check_branch
      %55 = sbr.rel (0) target = $region29
    $region28: #{tpu_custom_call.1} parent=1 // pred_region
      %56 = dma.done [#allocation6], 2048
    $region29: #{tpu_custom_call.1} parent=1 // pred_fallthru
      _
    // Predicated region
    $region30: #{tpu_custom_call.1} parent=1 // pred_check
      _
    $region31: #{tpu_custom_call.1} parent=1 // pred_check_branch
      %58 = sbr.rel (0) target = $region33
    $region32: #{tpu_custom_call.1} parent=1 // pred_region
      %59 = dma.done [#allocation6], 2048
    $region33: #{tpu_custom_call.1} parent=1 // pred_fallthru
      _
    %v61 = vld [vmem:[#allocation2] sm:$0xff]
    %v62 = vpack.c.bf16 %v61, %v61
    %v63 = vld [vmem:[#allocation5] sm:$0xff]
    %v64 = vld [vmem:[#allocation5 + $0x8] sm:$0xff]
    %v65 = vld [vmem:[#allocation5 + $0x10] sm:$0xff]
    %v66 = vld [vmem:[#allocation5 + $0x18] sm:$0xff]
    %v67 = vld [vmem:[#allocation5 + $0x20] sm:$0xff]
    %v68 = vld [vmem:[#allocation5 + $0x28] sm:$0xff]
    %v69 = vld [vmem:[#allocation5 + $0x30] sm:$0xff]
    %v70 = vld [vmem:[#allocation5 + $0x38] sm:$0xff]
    %v71 = vld [vmem:[#allocation5 + $0x40] sm:$0xff]
    %v72 = vld [vmem:[#allocation5 + $0x48] sm:$0xff]
    %v73 = vld [vmem:[#allocation5 + $0x50] sm:$0xff]
    %v74 = vld [vmem:[#allocation5 + $0x58] sm:$0xff]
    %v75 = vld [vmem:[#allocation5 + $0x60] sm:$0xff]
    %v76 = vld [vmem:[#allocation5 + $0x68] sm:$0xff]
    %v77 = vld [vmem:[#allocation5 + $0x70] sm:$0xff]
    %v78 = vld [vmem:[#allocation5 + $0x78] sm:$0xff]
    %v79 = vld [vmem:[%s2] sm:$0x3]
    %v81 = vlaneseq
    %v82 = vshrl.u32 %v81, 7
    %v83 = vsub.s32 0, %v82
    %v84 = vrot.slane %v79, %v83
    %v85 = vlaneseq
    %v86 = vshrl.u32 %v85, 7
    %v87 = vsub.s32 1, %v86
    %v88 = vrot.slane %v79, %v87
    %v107 = vunpack.c.l.b16 %v63
    %v108 = vunpack.c.h.b16 %v63
    %v109 = vunpack.c.l.b16 %v64
    %v110 = vunpack.c.h.b16 %v64
    %v111 = vunpack.c.l.b16 %v65
    %v112 = vunpack.c.h.b16 %v65
    %v113 = vunpack.c.l.b16 %v66
    %v114 = vunpack.c.h.b16 %v66
    %v115 = vunpack.c.l.b16 %v67
    %v116 = vunpack.c.h.b16 %v67
    %v117 = vunpack.c.l.b16 %v68
    %v118 = vunpack.c.h.b16 %v68
    %v119 = vunpack.c.l.b16 %v69
    %v120 = vunpack.c.h.b16 %v69
    %v121 = vunpack.c.l.b16 %v70
    %v122 = vunpack.c.h.b16 %v70
    %v123 = vunpack.c.l.b16 %v71
    %v124 = vunpack.c.h.b16 %v71
    %v125 = vunpack.c.l.b16 %v72
    %v126 = vunpack.c.h.b16 %v72
    %v127 = vunpack.c.l.b16 %v73
    %v128 = vunpack.c.h.b16 %v73
    %v129 = vunpack.c.l.b16 %v74
    %v130 = vunpack.c.h.b16 %v74
    %v131 = vunpack.c.l.b16 %v75
    %v132 = vunpack.c.h.b16 %v75
    %v133 = vunpack.c.l.b16 %v76
    %v134 = vunpack.c.h.b16 %v76
    %v135 = vunpack.c.l.b16 %v77
    %v136 = vunpack.c.h.b16 %v77
    %v137 = vunpack.c.l.b16 %v78
    %v138 = vunpack.c.h.b16 %v78
    %v139 = vpack.c.b16 %v109, %v107
    %v140 = vpack.c.b16 %v110, %v108
    %v141 = vpack.c.b16 %v113, %v111
    %v142 = vpack.c.b16 %v114, %v112
    %v143 = vpack.c.b16 %v117, %v115
    %v144 = vpack.c.b16 %v118, %v116
    %v145 = vpack.c.b16 %v121, %v119
    %v146 = vpack.c.b16 %v122, %v120
    %v147 = vpack.c.b16 %v125, %v123
    %v148 = vpack.c.b16 %v126, %v124
    %v149 = vpack.c.b16 %v129, %v127
    %v150 = vpack.c.b16 %v130, %v128
    %v151 = vpack.c.b16 %v133, %v131
    %v152 = vpack.c.b16 %v134, %v132
    %v153 = vpack.c.b16 %v137, %v135
    %v154 = vpack.c.b16 %v138, %v136
    %171 = vmatprep.subr.bf16.mxu0 %v140
    %172 = vmatpush1.bf16.msra.mxu0 %v139
    %173 = vmatprep.subr.bf16.mxu0 %v142
    %174 = vmatpush1.bf16.msra.mxu0 %v141
    %175 = vmatprep.subr.bf16.mxu0 %v144
    %176 = vmatpush1.bf16.msra.mxu0 %v143
    %177 = vmatprep.subr.bf16.mxu0 %v146
    %178 = vmatpush1.bf16.msra.mxu0 %v145
    %179 = vmatprep.subr.bf16.mxu0 %v148
    %180 = vmatpush1.bf16.msra.mxu0 %v147
    %181 = vmatprep.subr.bf16.mxu0 %v150
    %182 = vmatpush1.bf16.msra.mxu0 %v149
    %183 = vmatprep.subr.bf16.mxu0 %v152
    %184 = vmatpush1.bf16.msra.mxu0 %v151
    %185 = vmatprep.subr.bf16.mxu0 %v154
    %186 = vmatpush1.bf16.msra.mxu0 %v153
    %187 = vmatprep.subr.bf16.mxu0 0
    %188 = vmatpush1.bf16.msra.mxu0 0
    %189 = vmatprep.subr.bf16.mxu0 0
    %190 = vmatpush1.bf16.msra.mxu0 0
    %191 = vmatprep.subr.bf16.mxu0 0
    %192 = vmatpush1.bf16.msra.mxu0 0
    %193 = vmatprep.subr.bf16.mxu0 0
    %194 = vmatpush1.bf16.msra.mxu0 0
    %195 = vmatprep.subr.bf16.mxu0 0
    %196 = vmatpush1.bf16.msra.mxu0 0
    %197 = vmatprep.subr.bf16.mxu0 0
    %198 = vmatpush1.bf16.msra.mxu0 0
    %199 = vmatprep.subr.bf16.mxu0 0
    %200 = vmatpush1.bf16.msra.mxu0 0
    %201 = vmatprep.subr.bf16.mxu0 0
    %202 = vmatpush1.bf16.msra.mxu0 0
    %203 = vmatprep.mubr.bf16.mxu0 0
    %204 = vmatmul.mubr.bf16.gmra.mrb[0].mxu0 %v62
    %v205 = vpop.f32.mrb[0].mxu0
    %v206 = vadd.f32 %v84, %v205
    %v207 = vpop.f32.mrb[0].mxu0
    %v208 = vadd.f32 %v88, %v207
    %v209 = vpop.f32.mrb[0].mxu0
    %v210 = vpop.f32.mrb[0].mxu0
    %211 = vdwg.mxu0
    %v212 = vmax.f32 %v206, 0.0
    %v213 = vmax.f32 %v208, 0.0
    %v214 = vpack.c.bf16 %v212, %v212
    %v215 = vpack.c.bf16 %v213, %v213
    %v216 = vld [vmem:[#allocation7] sm:$0xf]
    %v217 = vld [vmem:[#allocation7 + $0x4] sm:$0xf]
    %v218 = vld [vmem:[#allocation7 + $0x8] sm:$0xf]
    %v219 = vld [vmem:[#allocation7 + $0xc] sm:$0xf]
    %v220 = vld [vmem:[#allocation7 + $0x10] sm:$0xf]
    %v221 = vld [vmem:[#allocation7 + $0x14] sm:$0xf]
    %v222 = vld [vmem:[#allocation7 + $0x18] sm:$0xf]
    %v223 = vld [vmem:[#allocation7 + $0x1c] sm:$0xf]
    %v224 = vld [vmem:[#allocation7 + $0x20] sm:$0xf]
    %v225 = vld [vmem:[#allocation7 + $0x24] sm:$0xf]
    %v226 = vld [vmem:[#allocation7 + $0x28] sm:$0xf]
    %v227 = vld [vmem:[#allocation7 + $0x2c] sm:$0xf]
    %v228 = vld [vmem:[#allocation7 + $0x30] sm:$0xf]
    %v229 = vld [vmem:[#allocation7 + $0x34] sm:$0xf]
    %v230 = vld [vmem:[#allocation7 + $0x38] sm:$0xf]
    %v231 = vld [vmem:[#allocation7 + $0x3c] sm:$0xf]
    %v232 = vld [vmem:[#allocation7 + $0x40] sm:$0xf]
    %v233 = vld [vmem:[#allocation7 + $0x44] sm:$0xf]
    %v234 = vld [vmem:[#allocation7 + $0x48] sm:$0xf]
    %v235 = vld [vmem:[#allocation7 + $0x4c] sm:$0xf]
    %v236 = vld [vmem:[#allocation7 + $0x50] sm:$0xf]
    %v237 = vld [vmem:[#allocation7 + $0x54] sm:$0xf]
    %v238 = vld [vmem:[#allocation7 + $0x58] sm:$0xf]
    %v239 = vld [vmem:[#allocation7 + $0x5c] sm:$0xf]
    %v240 = vld [vmem:[#allocation7 + $0x60] sm:$0xf]
    %v241 = vld [vmem:[#allocation7 + $0x64] sm:$0xf]
    %v242 = vld [vmem:[#allocation7 + $0x68] sm:$0xf]
    %v243 = vld [vmem:[#allocation7 + $0x6c] sm:$0xf]
    %v244 = vld [vmem:[#allocation7 + $0x70] sm:$0xf]
    %v245 = vld [vmem:[#allocation7 + $0x74] sm:$0xf]
    %v246 = vld [vmem:[#allocation7 + $0x78] sm:$0xf]
    %v247 = vld [vmem:[#allocation7 + $0x7c] sm:$0xf]
    %v248 = vld [vmem:[%s4] sm:$0x1]
    %v250 = vlaneseq
    %v251 = vshrl.u32 %v250, 7
    %v252 = vsub.s32 0, %v251
    %v253 = vrot.slane %v248, %v252
    %v287 = vunpack.c.l.b16 %v216
    %v288 = vunpack.c.l.b16 %v217
    %v289 = vunpack.c.l.b16 %v218
    %v290 = vunpack.c.l.b16 %v219
    %v291 = vunpack.c.l.b16 %v220
    %v292 = vunpack.c.l.b16 %v221
    %v293 = vunpack.c.l.b16 %v222
    %v294 = vunpack.c.l.b16 %v223
    %v295 = vunpack.c.l.b16 %v224
    %v296 = vunpack.c.l.b16 %v225
    %v297 = vunpack.c.l.b16 %v226
    %v298 = vunpack.c.l.b16 %v227
    %v299 = vunpack.c.l.b16 %v228
    %v300 = vunpack.c.l.b16 %v229
    %v301 = vunpack.c.l.b16 %v230
    %v302 = vunpack.c.l.b16 %v231
    %v303 = vunpack.c.l.b16 %v232
    %v304 = vunpack.c.l.b16 %v233
    %v305 = vunpack.c.l.b16 %v234
    %v306 = vunpack.c.l.b16 %v235
    %v307 = vunpack.c.l.b16 %v236
    %v308 = vunpack.c.l.b16 %v237
    %v309 = vunpack.c.l.b16 %v238
    %v310 = vunpack.c.l.b16 %v239
    %v311 = vunpack.c.l.b16 %v240
    %v312 = vunpack.c.l.b16 %v241
    %v313 = vunpack.c.l.b16 %v242
    %v314 = vunpack.c.l.b16 %v243
    %v315 = vunpack.c.l.b16 %v244
    %v316 = vunpack.c.l.b16 %v245
    %v317 = vunpack.c.l.b16 %v246
    %v318 = vunpack.c.l.b16 %v247
    %v319 = vpack.c.b16 %v288, %v287
    %v320 = vpack.c.b16 %v290, %v289
    %v321 = vpack.c.b16 %v292, %v291
    %v322 = vpack.c.b16 %v294, %v293
    %v323 = vpack.c.b16 %v296, %v295
    %v324 = vpack.c.b16 %v298, %v297
    %v325 = vpack.c.b16 %v300, %v299
    %v326 = vpack.c.b16 %v302, %v301
    %v327 = vpack.c.b16 %v304, %v303
    %v328 = vpack.c.b16 %v306, %v305
    %v329 = vpack.c.b16 %v308, %v307
    %v330 = vpack.c.b16 %v310, %v309
    %v331 = vpack.c.b16 %v312, %v311
    %v332 = vpack.c.b16 %v314, %v313
    %v333 = vpack.c.b16 %v316, %v315
    %v334 = vpack.c.b16 %v318, %v317
    %351 = vmatprep.subr.bf16.mxu0 0
    %352 = vmatpush1.bf16.msra.mxu0 %v319
    %353 = vmatprep.subr.bf16.mxu0 0
    %354 = vmatpush1.bf16.msra.mxu0 %v320
    %355 = vmatprep.subr.bf16.mxu0 0
    %356 = vmatpush1.bf16.msra.mxu0 %v321
    %357 = vmatprep.subr.bf16.mxu0 0
    %358 = vmatpush1.bf16.msra.mxu0 %v322
    %359 = vmatprep.subr.bf16.mxu0 0
    %360 = vmatpush1.bf16.msra.mxu0 %v323
    %361 = vmatprep.subr.bf16.mxu0 0
    %362 = vmatpush1.bf16.msra.mxu0 %v324
    %363 = vmatprep.subr.bf16.mxu0 0
    %364 = vmatpush1.bf16.msra.mxu0 %v325
    %365 = vmatprep.subr.bf16.mxu0 0
    %366 = vmatpush1.bf16.msra.mxu0 %v326
    %367 = vmatprep.subr.bf16.mxu0 0
    %368 = vmatpush1.bf16.msra.mxu0 %v327
    %369 = vmatprep.subr.bf16.mxu0 0
    %370 = vmatpush1.bf16.msra.mxu0 %v328
    %371 = vmatprep.subr.bf16.mxu0 0
    %372 = vmatpush1.bf16.msra.mxu0 %v329
    %373 = vmatprep.subr.bf16.mxu0 0
    %374 = vmatpush1.bf16.msra.mxu0 %v330
    %375 = vmatprep.subr.bf16.mxu0 0
    %376 = vmatpush1.bf16.msra.mxu0 %v331
    %377 = vmatprep.subr.bf16.mxu0 0
    %378 = vmatpush1.bf16.msra.mxu0 %v332
    %379 = vmatprep.subr.bf16.mxu0 0
    %380 = vmatpush1.bf16.msra.mxu0 %v333
    %381 = vmatprep.subr.bf16.mxu0 0
    %382 = vmatpush1.bf16.msra.mxu0 %v334
    %383 = vmatprep.mubr.bf16.mxu0 %v215
    %384 = vmatmul.mubr.bf16.gmra.mrb[0].mxu0 %v214
    %v385 = vpop.f32.mrb[0].mxu0
    %v386 = vadd.f32 %v253, %v385
    %v387 = vpop.f32.mrb[0].mxu0
    %v388 = vpop.f32.mrb[0].mxu0
    %v389 = vpop.f32.mrb[0].mxu0
    %390 = vdwg.mxu0
    %391 = vst [vmem:[#allocation8] sm:$0xff] %v386
    // Predicated region
    $region34: #{tpu_custom_call.1} parent=1 // pred_check
      _
    $region35: #{tpu_custom_call.1} parent=1 // pred_check_branch
      %393 = sbr.rel (0) target = $region37
    $region36: #{tpu_custom_call.1} parent=1 // pred_region
      %s395 = ssub.s32 128, 128
      %396 = vsyncadd [#allocation4], %s395
      %s398 = sshll.u32 [#allocation8], 4
      %s399 = int_to_ptr.vmem [resolvable:$true] %s398
      %401 = dma.vmem_to_hbm [thread:$0]  %s399, 128, %s5, [#allocation4]
    $region37: #{tpu_custom_call.1} parent=1 // pred_fallthru
      _
    // Predicated region
    $region38: #{tpu_custom_call.1} parent=1 // pred_check
      _
    $region39: #{tpu_custom_call.1} parent=1 // pred_check_branch
      %403 = sbr.rel (0) target = $region41
    $region40: #{tpu_custom_call.1} parent=1 // pred_region
      %404 = dma.done [#allocation4], 128
    $region41: #{tpu_custom_call.1} parent=1 // pred_fallthru
      _
    %405 = vsyncpa [#allocation3], 1
    %406 = vsyncpa [#allocation6], 1
    %407 = vsyncpa [#allocation4], 1

</llo_original>
